<compile_context>
chip_gen: v7x
topology: tpu7x:2x2x1
jax: 0.10.0
libtpu: 0.0.40
codegen_flags: <defaults>
</compile_context>

<pallas_src>
import jax
import jax.numpy as jnp
from jax import lax
from jax.experimental import pallas as pl
from jax.experimental.pallas import tpu as pltpu


def _round_up(x, m):
    return (x + m - 1) // m * m


# --------------------------------------------------------------------------
# Kernel
# --------------------------------------------------------------------------
def decoder_intent_kernel(hidden_ref, intent_d_ref, domain_d_ref,
                          vw_ref, vb_ref, ww_ref, wb_ref, fw_ref, fb_ref,
                          out_ref):
    # Weights arrive pre-transposed to (K, N); contract LHS dim 1 with RHS
    # dim 0 -> clean (M,K)x(K,N) MXU drive, no in-kernel transposes.
    dn = (((1,), (0,)), ((), ()))

    hidden = hidden_ref[...]       # f32 (TB, Hp)
    intent_d = intent_d_ref[...]   # f32 (TB, Hp)

    # W(domain_d): bf16 operands, f32 accumulation on the MXU.
    w_out = lax.dot_general(domain_d_ref[...], ww_ref[...], dn,
                            preferred_element_type=jnp.float32) + wb_ref[...]

    # tanh + gating + residual in f32 (safe on v5e: no bf16 VPU/EUP).
    t = jnp.tanh(intent_d + w_out)

    # V(tanh(...))
    v_out = lax.dot_general(t.astype(jnp.bfloat16), vw_ref[...], dn,
                            preferred_element_type=jnp.float32) + vb_ref[...]

    output = hidden + intent_d * v_out

    # fn(output) -> lane-dense (TB, Ip) slab.
    intent = lax.dot_general(output.astype(jnp.bfloat16), fw_ref[...], dn,
                             preferred_element_type=jnp.float32) + fb_ref[...]
    out_ref[...] = intent.astype(out_ref.dtype)


# --------------------------------------------------------------------------
# One-time parameter preparation (hoisted out of the per-call path)
# --------------------------------------------------------------------------
def prepare_params(params):
    """Pad, transpose to (K, N) and cast weights to bf16 once."""
    Vw, Vb = params["Vw"], params["Vb"]
    Ww, Wb = params["Ww"], params["Wb"]
    Fw, Fb = params["Fw"], params["Fb"]
    H = Vw.shape[1]
    I = Fw.shape[0]
    Hp = _round_up(max(H, 128), 128)
    Ip = _round_up(max(I, 128), 128)

    def pad_t(w, rows, cols):          # (out,in) -> transposed (in,out), padded
        wt = w.T
        return jnp.pad(wt, ((0, rows - wt.shape[0]),
                            (0, cols - wt.shape[1]))).astype(jnp.bfloat16)

    def pad_b(b, n):
        return jnp.pad(b, (0, n - b.shape[0])).reshape(1, n).astype(jnp.float32)

    return {
        "Vw_kn": pad_t(Vw, Hp, Hp), "Vb": pad_b(Vb, Hp),
        "Ww_kn": pad_t(Ww, Hp, Hp), "Wb": pad_b(Wb, Hp),
        "Fw_kn": pad_t(Fw, Hp, Ip), "Fb": pad_b(Fb, Ip),
        "hidden_size": H, "intent_size": I, "Hp": Hp, "Ip": Ip,
    }


# --------------------------------------------------------------------------
# Wrapper
# --------------------------------------------------------------------------
def _physical_vmem_bytes():
    try:
        return int(pltpu.get_tpu_info().vmem_capacity_bytes)
    except Exception:
        return 64 << 20  # conservative (v7x per-TC VMEM)


def _run_pallas(hid_p, int_p, dom_p, prepped, TB, nb, Bp, Hp, Ip,
                vmem_limit, cost, single_buffer_weights):
    act_spec = lambda: pl.BlockSpec((TB, Hp), lambda i: (i, 0))

    def wspec(shape):
        if single_buffer_weights:
            # Constant index_map -> resident; 1 buffer halves weight VMEM.
            return pl.BlockSpec(shape, lambda i: (0, 0),
                                pipeline_mode=pl.Buffered(1))
        return pl.BlockSpec(shape, lambda i: (0, 0))

    return pl.pallas_call(
        decoder_intent_kernel,
        out_shape=jax.ShapeDtypeStruct((Bp, Ip), jnp.float32),
        grid_spec=pltpu.PrefetchScalarGridSpec(
            num_scalar_prefetch=0,
            grid=(nb,),
            in_specs=[
                act_spec(),            # hidden   (f32)
                act_spec(),            # intent_d (f32)
                act_spec(),            # domain_d (bf16)
                wspec((Hp, Hp)),       # V weight (K, N)
                wspec((1, Hp)),        # V bias
                wspec((Hp, Hp)),       # W weight (K, N)
                wspec((1, Hp)),        # W bias
                wspec((Hp, Ip)),       # fn weight (K, N)
                wspec((1, Ip)),        # fn bias
            ],
            out_specs=pl.BlockSpec((TB, Ip), lambda i: (i, 0)),
        ),
        compiler_params=pltpu.CompilerParams(
            dimension_semantics=("parallel",),
            vmem_limit_bytes=vmem_limit,
        ),
        cost_estimate=cost,
    )(hid_p, int_p, dom_p,
      prepped["Vw_kn"], prepped["Vb"],
      prepped["Ww_kn"], prepped["Wb"],
      prepped["Fw_kn"], prepped["Fb"])


def decoder_intent(hidden, intent_d, domain_d, prepped):
    """hidden/intent_d/domain_d: (B, H) float32. Returns (B, intent_size)."""
    B, H = hidden.shape
    assert H == prepped["hidden_size"]
    Hp, Ip, I = prepped["Hp"], prepped["Ip"], prepped["intent_size"]

    # ---- batch tiling: sublane-aligned, >= 2 tiles when big enough so the
    # ---- "parallel" axis shards across v7x's two TensorCores, cap 256.
    if B <= 8:
        TB = _round_up(B, 8)
        Bp = TB
    else:
        # 16-row granularity keeps the bf16 domain_d tile layout-legal.
        TB = min(256, _round_up(pl.cdiv(_round_up(B, 16), 2), 16))
        Bp = _round_up(B, TB)
    nb = Bp // TB

    def pad2(a, r, c):
        return jnp.pad(a, ((0, r - a.shape[0]), (0, c - a.shape[1])))

    hid_p = pad2(hidden, Bp, Hp)
    int_p = pad2(intent_d, Bp, Hp)
    # domain_d is only ever an MXU operand -> bf16 in the wrapper.
    dom_p = pad2(domain_d, Bp, Hp).astype(jnp.bfloat16)

    # ---- VMEM budget (generation-aware clamp; v7x = 64 MiB per TC) ----
    wbytes = ((prepped["Vw_kn"].size + prepped["Ww_kn"].size
               + prepped["Fw_kn"].size) * 2
              + (prepped["Vb"].size + prepped["Wb"].size
                 + prepped["Fb"].size) * 4)
    act_bytes = 2 * (2 * TB * Hp * 4 + TB * Hp * 2)   # double-buffered tiles
    out_bytes = 2 * TB * Ip * 4
    need = 2 * wbytes + act_bytes + out_bytes + (8 << 20)
    phys = _physical_vmem_bytes()
    vmem_limit = int(min(max(need, 32 << 20), int(0.85 * phys)))

    cost = pl.CostEstimate(
        flops=2 * Bp * Hp * (2 * Hp + Ip),
        transcendentals=Bp * Hp,
        bytes_accessed=wbytes + Bp * Hp * (4 + 4 + 2) + Bp * Ip * 4,
    )

    try:
        out_p = _run_pallas(hid_p, int_p, dom_p, prepped, TB, nb, Bp, Hp, Ip,
                            vmem_limit, cost, single_buffer_weights=True)
    except Exception:
        # Older/newer jax without per-spec pipeline_mode support: fall back
        # to default (double-buffered) resident weights.
        out_p = _run_pallas(hid_p, int_p, dom_p, prepped, TB, nb, Bp, Hp, Ip,
                            vmem_limit, cost, single_buffer_weights=False)

    return out_p[:B, :I]


# --------------------------------------------------------------------------
# Synthetic init + pure-JAX reference
# --------------------------------------------------------------------------
def init_params(key, hidden_size, intent_size):
    """Deterministic synthetic init (PyTorch-style uniform bounds)."""
    ks = jax.random.split(key, 6)
    bound = 1.0 / jnp.sqrt(hidden_size)

    def u(k, shape):
        return jax.random.uniform(k, shape, jnp.float32, -bound, bound)

    return {
        "Vw": u(ks[0], (hidden_size, hidden_size)),
        "Vb": u(ks[1], (hidden_size,)),
        "Ww": u(ks[2], (hidden_size, hidden_size)),
        "Wb": u(ks[3], (hidden_size,)),
        "Fw": u(ks[4], (intent_size, hidden_size)),
        "Fb": u(ks[5], (intent_size,)),
    }


def reference(hidden, intent_d, domain_d, p):
    w_out = domain_d @ p["Ww"].T + p["Wb"]
    v_out = jnp.tanh(intent_d + w_out) @ p["Vw"].T + p["Vb"]
    gate = intent_d * v_out
    output = hidden + gate
    return output @ p["Fw"].T + p["Fb"]


if __name__ == "__main__":
    B, H, INTENT = 8, 32, 16
    key = jax.random.PRNGKey(0)
    k_h, k_i, k_d, k_p = jax.random.split(key, 4)

    hidden = jax.random.normal(k_h, (B, H), jnp.float32)
    intent_d = jax.random.normal(k_i, (B, H), jnp.float32)
    domain_d = jax.random.normal(k_d, (B, H), jnp.float32)

    params = init_params(k_p, H, INTENT)
    prepped = prepare_params(params)           # one-time weight prep

    out = decoder_intent(hidden, intent_d, domain_d, prepped)
    out = jax.block_until_ready(out)

    ref = reference(hidden, intent_d, domain_d, params)
    assert out.shape == (B, INTENT)
    # bf16 MXU operands with f32 accumulation -> loosened tolerance vs f32 ref.
    assert jnp.allclose(out, ref, atol=5e-2, rtol=5e-2), (
        f"max err {jnp.max(jnp.abs(out - ref))}")
    print("KERNEL_OK")
</pallas_src>

<mosaic_0001>
module attributes {stable_mosaic.version = 11 : i64} {
  func.func @decoder_intent_kernel(%arg0: i32, %arg1: memref<8x128xf32, #tpu.memory_space<vmem>>, %arg2: memref<8x128xf32, #tpu.memory_space<vmem>>, %arg3: memref<8x128xbf16, #tpu.memory_space<vmem>>, %arg4: memref<128x128xbf16, #tpu.memory_space<vmem>>, %arg5: memref<1x128xf32, #tpu.memory_space<vmem>>, %arg6: memref<128x128xbf16, #tpu.memory_space<vmem>>, %arg7: memref<1x128xf32, #tpu.memory_space<vmem>>, %arg8: memref<128x128xbf16, #tpu.memory_space<vmem>>, %arg9: memref<1x128xf32, #tpu.memory_space<vmem>>, %arg10: memref<8x128xf32, #tpu.memory_space<vmem>>) attributes {dimension_semantics = [#tpu.dimension_semantics<parallel>], iteration_bounds = array<i64: 1>, scalar_prefetch = 0 : i64, scratch_operands = 0 : i64, tpu.core_type = #tpu.core_type<tc>, window_params = [{transform_indices = @transform_0, window_bounds = array<i64: 8, 128>}, {transform_indices = @transform_1, window_bounds = array<i64: 8, 128>}, {transform_indices = @transform_2, window_bounds = array<i64: 8, 128>}, {pipeline_mode = #tpu.pipeline_mode<synchronous>, transform_indices = @transform_3, window_bounds = array<i64: 128, 128>}, {pipeline_mode = #tpu.pipeline_mode<synchronous>, transform_indices = @transform_4, window_bounds = array<i64: 1, 128>}, {pipeline_mode = #tpu.pipeline_mode<synchronous>, transform_indices = @transform_5, window_bounds = array<i64: 128, 128>}, {pipeline_mode = #tpu.pipeline_mode<synchronous>, transform_indices = @transform_6, window_bounds = array<i64: 1, 128>}, {pipeline_mode = #tpu.pipeline_mode<synchronous>, transform_indices = @transform_7, window_bounds = array<i64: 128, 128>}, {pipeline_mode = #tpu.pipeline_mode<synchronous>, transform_indices = @transform_8, window_bounds = array<i64: 1, 128>}, {transform_indices = @transform_9, window_bounds = array<i64: 8, 128>}]} {
    %c0 = arith.constant 0 : index
    %c0_0 = arith.constant 0 : index
    %0 = vector.load %arg1[%c0, %c0_0] : memref<8x128xf32, #tpu.memory_space<vmem>>, vector<8x128xf32>
    %c0_1 = arith.constant 0 : index
    %c0_2 = arith.constant 0 : index
    %1 = vector.load %arg2[%c0_1, %c0_2] : memref<8x128xf32, #tpu.memory_space<vmem>>, vector<8x128xf32>
    %c0_3 = arith.constant 0 : index
    %c0_4 = arith.constant 0 : index
    %2 = vector.load %arg3[%c0_3, %c0_4] : memref<8x128xbf16, #tpu.memory_space<vmem>>, vector<8x128xbf16>
    %c0_5 = arith.constant 0 : index
    %c0_6 = arith.constant 0 : index
    %3 = vector.load %arg6[%c0_5, %c0_6] : memref<128x128xbf16, #tpu.memory_space<vmem>>, vector<128x128xbf16>
    %cst = arith.constant dense<0.000000e+00> : vector<8x128xf32>
    %4 = tpu.matmul %2, %3, %cst {dimension_numbers = #tpu.dot_dimension_numbers<[1], [0], [0], [1], [0, 0, 1, 1], [], []>} : vector<8x128xbf16>, vector<128x128xbf16>, vector<8x128xf32> -> vector<8x128xf32>
    %c0_7 = arith.constant 0 : index
    %c0_8 = arith.constant 0 : index
    %5 = vector.load %arg7[%c0_7, %c0_8] : memref<1x128xf32, #tpu.memory_space<vmem>>, vector<1x128xf32>
    %6 = vector.broadcast %5 : vector<1x128xf32> to vector<8x128xf32>
    %7 = arith.addf %4, %6 : vector<8x128xf32>
    %8 = arith.addf %1, %7 : vector<8x128xf32>
    %9 = math.tanh %8 : vector<8x128xf32>
    %10 = arith.truncf %9 : vector<8x128xf32> to vector<8x128xbf16>
    %c0_9 = arith.constant 0 : index
    %c0_10 = arith.constant 0 : index
    %11 = vector.load %arg4[%c0_9, %c0_10] : memref<128x128xbf16, #tpu.memory_space<vmem>>, vector<128x128xbf16>
    %cst_11 = arith.constant dense<0.000000e+00> : vector<8x128xf32>
    %12 = tpu.matmul %10, %11, %cst_11 {dimension_numbers = #tpu.dot_dimension_numbers<[1], [0], [0], [1], [0, 0, 1, 1], [], []>} : vector<8x128xbf16>, vector<128x128xbf16>, vector<8x128xf32> -> vector<8x128xf32>
    %c0_12 = arith.constant 0 : index
    %c0_13 = arith.constant 0 : index
    %13 = vector.load %arg5[%c0_12, %c0_13] : memref<1x128xf32, #tpu.memory_space<vmem>>, vector<1x128xf32>
    %14 = vector.broadcast %13 : vector<1x128xf32> to vector<8x128xf32>
    %15 = arith.addf %12, %14 : vector<8x128xf32>
    %16 = arith.mulf %1, %15 : vector<8x128xf32>
    %17 = arith.addf %0, %16 : vector<8x128xf32>
    %18 = arith.truncf %17 : vector<8x128xf32> to vector<8x128xbf16>
    %c0_14 = arith.constant 0 : index
    %c0_15 = arith.constant 0 : index
    %19 = vector.load %arg8[%c0_14, %c0_15] : memref<128x128xbf16, #tpu.memory_space<vmem>>, vector<128x128xbf16>
    %cst_16 = arith.constant dense<0.000000e+00> : vector<8x128xf32>
    %20 = tpu.matmul %18, %19, %cst_16 {dimension_numbers = #tpu.dot_dimension_numbers<[1], [0], [0], [1], [0, 0, 1, 1], [], []>} : vector<8x128xbf16>, vector<128x128xbf16>, vector<8x128xf32> -> vector<8x128xf32>
    %c0_17 = arith.constant 0 : index
    %c0_18 = arith.constant 0 : index
    %21 = vector.load %arg9[%c0_17, %c0_18] : memref<1x128xf32, #tpu.memory_space<vmem>>, vector<1x128xf32>
    %22 = vector.broadcast %21 : vector<1x128xf32> to vector<8x128xf32>
    %23 = arith.addf %20, %22 : vector<8x128xf32>
    %c0_19 = arith.constant 0 : index
    %c0_20 = arith.constant 0 : index
    %24 = vector.load %arg10[%c0_19, %c0_20] : memref<8x128xf32, #tpu.memory_space<vmem>>, vector<8x128xf32>
    tpu.vector_store %arg10[%c0_19, %c0_20], %23 {strides = array<i32>} : memref<8x128xf32, #tpu.memory_space<vmem>>, vector<8x128xf32>,
    return
  }
  func.func @transform_0(%arg0: i32) -> (i32, i32) {
    %c0_i32 = arith.constant 0 : i32
    %c0_i32_0 = arith.constant 0 : i32
    return %arg0, %c0_i32 : i32, i32
  }
  func.func @transform_1(%arg0: i32) -> (i32, i32) {
    %c0_i32 = arith.constant 0 : i32
    %c0_i32_0 = arith.constant 0 : i32
    return %arg0, %c0_i32 : i32, i32
  }
  func.func @transform_2(%arg0: i32) -> (i32, i32) {
    %c0_i32 = arith.constant 0 : i32
    %c0_i32_0 = arith.constant 0 : i32
    return %arg0, %c0_i32 : i32, i32
  }
  func.func @transform_3(%arg0: i32) -> (i32, i32) {
    %c0_i32 = arith.constant 0 : i32
    %c0_i32_0 = arith.constant 0 : i32
    %c0_i32_1 = arith.constant 0 : i32
    return %c0_i32, %c0_i32_0 : i32, i32
  }
  func.func @transform_4(%arg0: i32) -> (i32, i32) {
    %c0_i32 = arith.constant 0 : i32
    %c0_i32_0 = arith.constant 0 : i32
    %c0_i32_1 = arith.constant 0 : i32
    return %c0_i32, %c0_i32_0 : i32, i32
  }
  func.func @transform_5(%arg0: i32) -> (i32, i32) {
    %c0_i32 = arith.constant 0 : i32
    %c0_i32_0 = arith.constant 0 : i32
    %c0_i32_1 = arith.constant 0 : i32
    return %c0_i32, %c0_i32_0 : i32, i32
  }
  func.func @transform_6(%arg0: i32) -> (i32, i32) {
    %c0_i32 = arith.constant 0 : i32
    %c0_i32_0 = arith.constant 0 : i32
    %c0_i32_1 = arith.constant 0 : i32
    return %c0_i32, %c0_i32_0 : i32, i32
  }
  func.func @transform_7(%arg0: i32) -> (i32, i32) {
    %c0_i32 = arith.constant 0 : i32
    %c0_i32_0 = arith.constant 0 : i32
    %c0_i32_1 = arith.constant 0 : i32
    return %c0_i32, %c0_i32_0 : i32, i32
  }
  func.func @transform_8(%arg0: i32) -> (i32, i32) {
    %c0_i32 = arith.constant 0 : i32
    %c0_i32_0 = arith.constant 0 : i32
    %c0_i32_1 = arith.constant 0 : i32
    return %c0_i32, %c0_i32_0 : i32, i32
  }
  func.func @transform_9(%arg0: i32) -> (i32, i32) {
    %c0_i32 = arith.constant 0 : i32
    %c0_i32_0 = arith.constant 0 : i32
    return %arg0, %c0_i32 : i32, i32
  }
}

module attributes {stable_mosaic.version = 11 : i64} {
  func.func @decoder_intent_kernel(%arg0: i32, %arg1: memref<8x128xf32, #tpu.memory_space<vmem>>, %arg2: memref<8x128xf32, #tpu.memory_space<vmem>>, %arg3: memref<8x128xbf16, #tpu.memory_space<vmem>>, %arg4: memref<128x128xbf16, #tpu.memory_space<vmem>>, %arg5: memref<1x128xf32, #tpu.memory_space<vmem>>, %arg6: memref<128x128xbf16, #tpu.memory_space<vmem>>, %arg7: memref<1x128xf32, #tpu.memory_space<vmem>>, %arg8: memref<128x128xbf16, #tpu.memory_space<vmem>>, %arg9: memref<1x128xf32, #tpu.memory_space<vmem>>, %arg10: memref<8x128xf32, #tpu.memory_space<vmem>>) attributes {dimension_semantics = [#tpu.dimension_semantics<parallel>], iteration_bounds = array<i64: 1>, scalar_prefetch = 0 : i64, scratch_operands = 0 : i64, tpu.core_type = #tpu.core_type<tc>, window_params = [{transform_indices = @transform_0, window_bounds = array<i64: 8, 128>}, {transform_indices = @transform_1, window_bounds = array<i64: 8, 128>}, {transform_indices = @transform_2, window_bounds = array<i64: 8, 128>}, {pipeline_mode = #tpu.pipeline_mode<synchronous>, transform_indices = @transform_3, window_bounds = array<i64: 128, 128>}, {pipeline_mode = #tpu.pipeline_mode<synchronous>, transform_indices = @transform_4, window_bounds = array<i64: 1, 128>}, {pipeline_mode = #tpu.pipeline_mode<synchronous>, transform_indices = @transform_5, window_bounds = array<i64: 128, 128>}, {pipeline_mode = #tpu.pipeline_mode<synchronous>, transform_indices = @transform_6, window_bounds = array<i64: 1, 128>}, {pipeline_mode = #tpu.pipeline_mode<synchronous>, transform_indices = @transform_7, window_bounds = array<i64: 128, 128>}, {pipeline_mode = #tpu.pipeline_mode<synchronous>, transform_indices = @transform_8, window_bounds = array<i64: 1, 128>}, {transform_indices = @transform_9, window_bounds = array<i64: 8, 128>}]} {
    %c0 = arith.constant 0 : index
    %c0_0 = arith.constant 0 : index
    %0 = vector.load %arg1[%c0, %c0_0] : memref<8x128xf32, #tpu.memory_space<vmem>>, vector<8x128xf32>
    %c0_1 = arith.constant 0 : index
    %c0_2 = arith.constant 0 : index
    %1 = vector.load %arg2[%c0_1, %c0_2] : memref<8x128xf32, #tpu.memory_space<vmem>>, vector<8x128xf32>
    %c0_3 = arith.constant 0 : index
    %c0_4 = arith.constant 0 : index
    %2 = vector.load %arg3[%c0_3, %c0_4] : memref<8x128xbf16, #tpu.memory_space<vmem>>, vector<8x128xbf16>
    %c0_5 = arith.constant 0 : index
    %c0_6 = arith.constant 0 : index
    %3 = vector.load %arg6[%c0_5, %c0_6] : memref<128x128xbf16, #tpu.memory_space<vmem>>, vector<128x128xbf16>
    %cst = arith.constant dense<0.000000e+00> : vector<8x128xf32>
    %4 = tpu.matmul %2, %3, %cst {dimension_numbers = #tpu.dot_dimension_numbers<[1], [0], [0], [1], [0, 0, 1, 1], [], []>} : vector<8x128xbf16>, vector<128x128xbf16>, vector<8x128xf32> -> vector<8x128xf32>
    %c0_7 = arith.constant 0 : index
    %c0_8 = arith.constant 0 : index
    %5 = vector.load %arg7[%c0_7, %c0_8] : memref<1x128xf32, #tpu.memory_space<vmem>>, vector<1x128xf32>
    %6 = vector.broadcast %5 : vector<1x128xf32> to vector<8x128xf32>
    %7 = arith.addf %4, %6 : vector<8x128xf32>
    %8 = arith.addf %1, %7 : vector<8x128xf32>
    %9 = math.tanh %8 : vector<8x128xf32>
    %10 = arith.truncf %9 : vector<8x128xf32> to vector<8x128xbf16>
    %c0_9 = arith.constant 0 : index
    %c0_10 = arith.constant 0 : index
    %11 = vector.load %arg4[%c0_9, %c0_10] : memref<128x128xbf16, #tpu.memory_space<vmem>>, vector<128x128xbf16>
    %cst_11 = arith.constant dense<0.000000e+00> : vector<8x128xf32>
    %12 = tpu.matmul %10, %11, %cst_11 {dimension_numbers = #tpu.dot_dimension_numbers<[1], [0], [0], [1], [0, 0, 1, 1], [], []>} : vector<8x128xbf16>, vector<128x128xbf16>, vector<8x128xf32> -> vector<8x128xf32>
    %c0_12 = arith.constant 0 : index
    %c0_13 = arith.constant 0 : index
    %13 = vector.load %arg5[%c0_12, %c0_13] : memref<1x128xf32, #tpu.memory_space<vmem>>, vector<1x128xf32>
    %14 = vector.broadcast %13 : vector<1x128xf32> to vector<8x128xf32>
    %15 = arith.addf %12, %14 : vector<8x128xf32>
    %16 = arith.mulf %1, %15 : vector<8x128xf32>
    %17 = arith.addf %0, %16 : vector<8x128xf32>
    %18 = arith.truncf %17 : vector<8x128xf32> to vector<8x128xbf16>
    %c0_14 = arith.constant 0 : index
    %c0_15 = arith.constant 0 : index
    %19 = vector.load %arg8[%c0_14, %c0_15] : memref<128x128xbf16, #tpu.memory_space<vmem>>, vector<128x128xbf16>
    %cst_16 = arith.constant dense<0.000000e+00> : vector<8x128xf32>
    %20 = tpu.matmul %18, %19, %cst_16 {dimension_numbers = #tpu.dot_dimension_numbers<[1], [0], [0], [1], [0, 0, 1, 1], [], []>} : vector<8x128xbf16>, vector<128x128xbf16>, vector<8x128xf32> -> vector<8x128xf32>
    %c0_17 = arith.constant 0 : index
    %c0_18 = arith.constant 0 : index
    %21 = vector.load %arg9[%c0_17, %c0_18] : memref<1x128xf32, #tpu.memory_space<vmem>>, vector<1x128xf32>
    %22 = vector.broadcast %21 : vector<1x128xf32> to vector<8x128xf32>
    %23 = arith.addf %20, %22 : vector<8x128xf32>
    %c0_19 = arith.constant 0 : index
    %c0_20 = arith.constant 0 : index
    %24 = vector.load %arg10[%c0_19, %c0_20] : memref<8x128xf32, #tpu.memory_space<vmem>>, vector<8x128xf32>
    tpu.vector_store %arg10[%c0_19, %c0_20], %23 {strides = array<i32>} : memref<8x128xf32, #tpu.memory_space<vmem>>, vector<8x128xf32>,
    return
  }
  func.func @transform_0(%arg0: i32) -> (i32, i32) {
    %c0_i32 = arith.constant 0 : i32
    %c0_i32_0 = arith.constant 0 : i32
    return %arg0, %c0_i32 : i32, i32
  }
  func.func @transform_1(%arg0: i32) -> (i32, i32) {
    %c0_i32 = arith.constant 0 : i32
    %c0_i32_0 = arith.constant 0 : i32
    return %arg0, %c0_i32 : i32, i32
  }
  func.func @transform_2(%arg0: i32) -> (i32, i32) {
    %c0_i32 = arith.constant 0 : i32
    %c0_i32_0 = arith.constant 0 : i32
    return %arg0, %c0_i32 : i32, i32
  }
  func.func @transform_3(%arg0: i32) -> (i32, i32) {
    %c0_i32 = arith.constant 0 : i32
    %c0_i32_0 = arith.constant 0 : i32
    %c0_i32_1 = arith.constant 0 : i32
    return %c0_i32, %c0_i32_0 : i32, i32
  }
  func.func @transform_4(%arg0: i32) -> (i32, i32) {
    %c0_i32 = arith.constant 0 : i32
    %c0_i32_0 = arith.constant 0 : i32
    %c0_i32_1 = arith.constant 0 : i32
    return %c0_i32, %c0_i32_0 : i32, i32
  }
  func.func @transform_5(%arg0: i32) -> (i32, i32) {
    %c0_i32 = arith.constant 0 : i32
    %c0_i32_0 = arith.constant 0 : i32
    %c0_i32_1 = arith.constant 0 : i32
    return %c0_i32, %c0_i32_0 : i32, i32
  }
  func.func @transform_6(%arg0: i32) -> (i32, i32) {
    %c0_i32 = arith.constant 0 : i32
    %c0_i32_0 = arith.constant 0 : i32
    %c0_i32_1 = arith.constant 0 : i32
    return %c0_i32, %c0_i32_0 : i32, i32
  }
  func.func @transform_7(%arg0: i32) -> (i32, i32) {
    %c0_i32 = arith.constant 0 : i32
    %c0_i32_0 = arith.constant 0 : i32
    %c0_i32_1 = arith.constant 0 : i32
    return %c0_i32, %c0_i32_0 : i32, i32
  }
  func.func @transform_8(%arg0: i32) -> (i32, i32) {
    %c0_i32 = arith.constant 0 : i32
    %c0_i32_0 = arith.constant 0 : i32
    %c0_i32_1 = arith.constant 0 : i32
    return %c0_i32, %c0_i32_0 : i32, i32
  }
  func.func @transform_9(%arg0: i32) -> (i32, i32) {
    %c0_i32 = arith.constant 0 : i32
    %c0_i32_0 = arith.constant 0 : i32
    return %arg0, %c0_i32 : i32, i32
  }
}

</mosaic_0001>

<llo_original>
// kernel: tpu_custom_call.1
$region0: #{tpu_custom_call.1}
  #allocation0 [shape = 'u32[]', space=smem, size = 0x4, offset = 0x4, fixed_abs, tag = 'smem constant byte address 0x4 - core index']
  #allocation1 [shape = 'u32[144,128]{1,0:T(1,128)}', space=vmem, size = 0x12000, scoped, tag = 'internal scratch']
  %s0 = inlined_call_operand.hbm [shape: f32[8,128], index: 0, kind: input, shape index: {}]
  %s1 = inlined_call_operand.hbm [shape: f32[8,128], index: 1, kind: input, shape index: {}]
  %s2 = inlined_call_operand.vmem [shape: bf16[8,128], index: 2, kind: input, shape index: {}]
  %s3 = inlined_call_operand.hbm [shape: bf16[128,128], index: 3, kind: input, shape index: {}]
  %s4 = inlined_call_operand.vmem [shape: f32[1,128], index: 4, kind: input, shape index: {}]
  %s5 = inlined_call_operand.hbm [shape: bf16[128,128], index: 5, kind: input, shape index: {}]
  %s6 = inlined_call_operand.vmem [shape: f32[1,128], index: 6, kind: input, shape index: {}]
  %s7 = inlined_call_operand.hbm [shape: bf16[128,128], index: 7, kind: input, shape index: {}]
  %s8 = inlined_call_operand.vmem [shape: f32[1,128], index: 8, kind: input, shape index: {}]
  %s9 = inlined_call_operand.hbm [shape: f32[8,128], index: 9, kind: output, shape index: {}]
  %s10 = sld [smem:[#allocation0]]
  $region66: #{tpu_custom_call.1} parent=0
    _
  %s12 = ssub.s32 1, %s10
  %s13 = scalar_select 0, %s12, %s10
  $region1: #{tpu_custom_call.1} parent=0
    #allocation2 [shape = 'u8[4096]{0}', space=vmem, size = 0x1000, scoped, tag = 'input window, operand 0, single buffered']
    #allocation3 [shape = 's32[1]{0}', space=sflag, size = 0x4, scoped, tag = 'scoped memory for tpu_custom_call.1']
    #allocation4 [shape = 's32[1]{0}', space=sflag, size = 0x4, scoped, tag = 'scoped memory for tpu_custom_call.1']
    #allocation5 [shape = 'u8[4096]{0}', space=vmem, size = 0x1000, scoped, tag = 'input window, operand 1, single buffered']
    #allocation6 [shape = 's32[1]{0}', space=sflag, size = 0x4, scoped, tag = 'scoped memory for tpu_custom_call.1']
    #allocation7 [shape = 'u8[32768]{0}', space=vmem, size = 0x8000, scoped, tag = 'input window, operand 3, single buffered']
    #allocation8 [shape = 'u8[32768]{0}', space=vmem, size = 0x8000, scoped, tag = 'input window, operand 5, single buffered']
    #allocation9 [shape = 's32[1]{0}', space=sflag, size = 0x4, scoped, tag = 'scoped memory for tpu_custom_call.1']
    #allocation10 [shape = 'u8[32768]{0}', space=vmem, size = 0x8000, scoped, tag = 'input window, operand 7, single buffered']
    #allocation11 [shape = 'u8[4096]{0}', space=vmem, size = 0x1000, scoped, tag = 'output window, operand 0, single buffered']
    %14 = vsyncpa [#allocation3], 0
    %15 = vsyncpa [#allocation6], 0
    %16 = vsyncpa [#allocation9], 0
    %17 = vsyncpa [#allocation4], 0
    // Predicated region
    $region2: #{tpu_custom_call.1} parent=1 // pred_check
      _
    $region3: #{tpu_custom_call.1} parent=1 // pred_check_branch
      %19 = sbr.rel (0) target = $region5
    $region4: #{tpu_custom_call.1} parent=1 // pred_region
      %s21 = ssub.s32 128, 128
      %22 = vsyncadd [#allocation3], %s21
      %s24 = sshll.u32 [#allocation2], 4
      %s25 = int_to_ptr.vmem [resolvable:$true] %s24
      %27 = dma.hbm_to_vmem [thread:$0]  %s0, 128, %s25, [#allocation3]
    $region5: #{tpu_custom_call.1} parent=1 // pred_fallthru
      _
    // Predicated region
    $region6: #{tpu_custom_call.1} parent=1 // pred_check
      _
    $region7: #{tpu_custom_call.1} parent=1 // pred_check_branch
      %29 = sbr.rel (0) target = $region9
    $region8: #{tpu_custom_call.1} parent=1 // pred_region
      %s31 = ssub.s32 128, 128
      %32 = vsyncadd [#allocation6], %s31
      %s34 = sshll.u32 [#allocation5], 4
      %s35 = int_to_ptr.vmem [resolvable:$true] %s34
      %37 = dma.hbm_to_vmem [thread:$0]  %s1, 128, %s35, [#allocation6]
    $region9: #{tpu_custom_call.1} parent=1 // pred_fallthru
      _
    // Predicated region
    $region10: #{tpu_custom_call.1} parent=1 // pred_check
      _
    $region11: #{tpu_custom_call.1} parent=1 // pred_check_branch
      %39 = sbr.rel (0) target = $region13
    $region12: #{tpu_custom_call.1} parent=1 // pred_region
      _
    $region13: #{tpu_custom_call.1} parent=1 // pred_fallthru
      _
    // Predicated region
    $region14: #{tpu_custom_call.1} parent=1 // pred_check
      _
    $region15: #{tpu_custom_call.1} parent=1 // pred_check_branch
      %41 = sbr.rel (0) target = $region17
    $region16: #{tpu_custom_call.1} parent=1 // pred_region
      %s43 = ssub.s32 1024, 1024
      %44 = vsyncadd [#allocation6], %s43
      %s45 = sshll.u32 [#allocation7], 4
      %s46 = int_to_ptr.vmem [resolvable:$true] %s45
      %51 = dma.hbm_to_vmem [thread:$0]  %s3, 1024, %s46, [#allocation6], 64, 64, 4
    $region17: #{tpu_custom_call.1} parent=1 // pred_fallthru
      _
    // Predicated region
    $region18: #{tpu_custom_call.1} parent=1 // pred_check
      _
    $region19: #{tpu_custom_call.1} parent=1 // pred_check_branch
      %53 = sbr.rel (0) target = $region21
    $region20: #{tpu_custom_call.1} parent=1 // pred_region
      _
    $region21: #{tpu_custom_call.1} parent=1 // pred_fallthru
      _
    // Predicated region
    $region22: #{tpu_custom_call.1} parent=1 // pred_check
      _
    $region23: #{tpu_custom_call.1} parent=1 // pred_check_branch
      %55 = sbr.rel (0) target = $region25
    $region24: #{tpu_custom_call.1} parent=1 // pred_region
      %s57 = ssub.s32 1024, 1024
      %58 = vsyncadd [#allocation9], %s57
      %s59 = sshll.u32 [#allocation8], 4
      %s60 = int_to_ptr.vmem [resolvable:$true] %s59
      %65 = dma.hbm_to_vmem [thread:$0]  %s5, 1024, %s60, [#allocation9], 64, 64, 4
    $region25: #{tpu_custom_call.1} parent=1 // pred_fallthru
      _
    // Predicated region
    $region26: #{tpu_custom_call.1} parent=1 // pred_check
      _
    $region27: #{tpu_custom_call.1} parent=1 // pred_check_branch
      %67 = sbr.rel (0) target = $region29
    $region28: #{tpu_custom_call.1} parent=1 // pred_region
      _
    $region29: #{tpu_custom_call.1} parent=1 // pred_fallthru
      _
    // Predicated region
    $region30: #{tpu_custom_call.1} parent=1 // pred_check
      _
    $region31: #{tpu_custom_call.1} parent=1 // pred_check_branch
      %69 = sbr.rel (0) target = $region33
    $region32: #{tpu_custom_call.1} parent=1 // pred_region
      %s71 = ssub.s32 1024, 1024
      %72 = vsyncadd [#allocation9], %s71
      %s73 = sshll.u32 [#allocation10], 4
      %s74 = int_to_ptr.vmem [resolvable:$true] %s73
      %79 = dma.hbm_to_vmem [thread:$0]  %s7, 1024, %s74, [#allocation9], 64, 64, 4
    $region33: #{tpu_custom_call.1} parent=1 // pred_fallthru
      _
    // Predicated region
    $region34: #{tpu_custom_call.1} parent=1 // pred_check
      _
    $region35: #{tpu_custom_call.1} parent=1 // pred_check_branch
      %81 = sbr.rel (0) target = $region37
    $region36: #{tpu_custom_call.1} parent=1 // pred_region
      _
    $region37: #{tpu_custom_call.1} parent=1 // pred_fallthru
      _
    // Predicated region
    $region38: #{tpu_custom_call.1} parent=1 // pred_check
      _
    $region39: #{tpu_custom_call.1} parent=1 // pred_check_branch
      %83 = sbr.rel (0) target = $region41
    $region40: #{tpu_custom_call.1} parent=1 // pred_region
      %84 = dma.done [#allocation3], 128
    $region41: #{tpu_custom_call.1} parent=1 // pred_fallthru
      _
    // Predicated region
    $region42: #{tpu_custom_call.1} parent=1 // pred_check
      _
    $region43: #{tpu_custom_call.1} parent=1 // pred_check_branch
      %86 = sbr.rel (0) target = $region45
    $region44: #{tpu_custom_call.1} parent=1 // pred_region
      %87 = dma.done [#allocation6], 128
    $region45: #{tpu_custom_call.1} parent=1 // pred_fallthru
      _
    // Predicated region
    $region46: #{tpu_custom_call.1} parent=1 // pred_check
      _
    $region47: #{tpu_custom_call.1} parent=1 // pred_check_branch
      %89 = sbr.rel (0) target = $region49
    $region48: #{tpu_custom_call.1} parent=1 // pred_region
      %90 = dma.done [#allocation6], 1024
    $region49: #{tpu_custom_call.1} parent=1 // pred_fallthru
      _
    // Predicated region
    $region50: #{tpu_custom_call.1} parent=1 // pred_check
      _
    $region51: #{tpu_custom_call.1} parent=1 // pred_check_branch
      %92 = sbr.rel (0) target = $region53
    $region52: #{tpu_custom_call.1} parent=1 // pred_region
      %93 = dma.done [#allocation9], 1024
    $region53: #{tpu_custom_call.1} parent=1 // pred_fallthru
      _
    // Predicated region
    $region54: #{tpu_custom_call.1} parent=1 // pred_check
      _
    $region55: #{tpu_custom_call.1} parent=1 // pred_check_branch
      %95 = sbr.rel (0) target = $region57
    $region56: #{tpu_custom_call.1} parent=1 // pred_region
      %96 = dma.done [#allocation9], 1024
    $region57: #{tpu_custom_call.1} parent=1 // pred_fallthru
      _
    %v98 = vld [vmem:[#allocation2] sm:$0xff]
    %v99 = vld [vmem:[#allocation5] sm:$0xff]
    %v100 = vld [vmem:[%s2] sm:$0xf]
    %v101 = vld [vmem:[#allocation8] sm:$0xf]
    %v102 = vld [vmem:[#allocation8 + $0x4] sm:$0xf]
    %v103 = vld [vmem:[#allocation8 + $0x8] sm:$0xf]
    %v104 = vld [vmem:[#allocation8 + $0xc] sm:$0xf]
    %v105 = vld [vmem:[#allocation8 + $0x10] sm:$0xf]
    %v106 = vld [vmem:[#allocation8 + $0x14] sm:$0xf]
    %v107 = vld [vmem:[#allocation8 + $0x18] sm:$0xf]
    %v108 = vld [vmem:[#allocation8 + $0x1c] sm:$0xf]
    %v109 = vld [vmem:[#allocation8 + $0x20] sm:$0xf]
    %v110 = vld [vmem:[#allocation8 + $0x24] sm:$0xf]
    %v111 = vld [vmem:[#allocation8 + $0x28] sm:$0xf]
    %v112 = vld [vmem:[#allocation8 + $0x2c] sm:$0xf]
    %v113 = vld [vmem:[#allocation8 + $0x30] sm:$0xf]
    %v114 = vld [vmem:[#allocation8 + $0x34] sm:$0xf]
    %v115 = vld [vmem:[#allocation8 + $0x38] sm:$0xf]
    %v116 = vld [vmem:[#allocation8 + $0x3c] sm:$0xf]
    %v117 = vld [vmem:[%s6] sm:$0x1]
    %v119 = vlaneseq
    %v120 = vshrl.u32 %v119, 7
    %v121 = vsub.s32 0, %v120
    %v122 = vrot.slane %v117, %v121
    %v140 = vunpack.c.l.b16 %v101
    %v141 = vunpack.c.l.b16 %v102
    %v142 = vunpack.c.l.b16 %v103
    %v143 = vunpack.c.l.b16 %v104
    %v144 = vunpack.c.l.b16 %v105
    %v145 = vunpack.c.l.b16 %v106
    %v146 = vunpack.c.l.b16 %v107
    %v147 = vunpack.c.l.b16 %v108
    %v148 = vunpack.c.l.b16 %v109
    %v149 = vunpack.c.l.b16 %v110
    %v150 = vunpack.c.l.b16 %v111
    %v151 = vunpack.c.l.b16 %v112
    %v152 = vunpack.c.l.b16 %v113
    %v153 = vunpack.c.l.b16 %v114
    %v154 = vunpack.c.l.b16 %v115
    %v155 = vunpack.c.l.b16 %v116
    %v156 = vpack.c.b16 %v141, %v140
    %v157 = vpack.c.b16 %v143, %v142
    %v158 = vpack.c.b16 %v145, %v144
    %v159 = vpack.c.b16 %v147, %v146
    %v160 = vpack.c.b16 %v149, %v148
    %v161 = vpack.c.b16 %v151, %v150
    %v162 = vpack.c.b16 %v153, %v152
    %v163 = vpack.c.b16 %v155, %v154
    %172 = vmatprep.subr.bf16.mxu0 0
    %173 = vmatpush1.bf16.msra.mxu0 %v156
    %174 = vmatprep.subr.bf16.mxu0 0
    %175 = vmatpush1.bf16.msra.mxu0 %v157
    %176 = vmatprep.subr.bf16.mxu0 0
    %177 = vmatpush1.bf16.msra.mxu0 %v158
    %178 = vmatprep.subr.bf16.mxu0 0
    %179 = vmatpush1.bf16.msra.mxu0 %v159
    %180 = vmatprep.subr.bf16.mxu0 0
    %181 = vmatpush1.bf16.msra.mxu0 %v160
    %182 = vmatprep.subr.bf16.mxu0 0
    %183 = vmatpush1.bf16.msra.mxu0 %v161
    %184 = vmatprep.subr.bf16.mxu0 0
    %185 = vmatpush1.bf16.msra.mxu0 %v162
    %186 = vmatprep.subr.bf16.mxu0 0
    %187 = vmatpush1.bf16.msra.mxu0 %v163
    %188 = vmatprep.subr.bf16.mxu0 0
    %189 = vmatpush1.bf16.msra.mxu0 0
    %190 = vmatprep.subr.bf16.mxu0 0
    %191 = vmatpush1.bf16.msra.mxu0 0
    %192 = vmatprep.subr.bf16.mxu0 0
    %193 = vmatpush1.bf16.msra.mxu0 0
    %194 = vmatprep.subr.bf16.mxu0 0
    %195 = vmatpush1.bf16.msra.mxu0 0
    %196 = vmatprep.subr.bf16.mxu0 0
    %197 = vmatpush1.bf16.msra.mxu0 0
    %198 = vmatprep.subr.bf16.mxu0 0
    %199 = vmatpush1.bf16.msra.mxu0 0
    %200 = vmatprep.subr.bf16.mxu0 0
    %201 = vmatpush1.bf16.msra.mxu0 0
    %202 = vmatprep.subr.bf16.mxu0 0
    %203 = vmatpush1.bf16.msra.mxu0 0
    %204 = vmatprep.mubr.bf16.mxu0 0
    %205 = vmatmul.mubr.bf16.gmra.mrb[0].mxu0 %v100
    %v206 = vpop.f32.mrb[0].mxu0
    %v207 = vadd.f32 %v122, %v206
    %v208 = vpop.f32.mrb[0].mxu0
    %v209 = vpop.f32.mrb[0].mxu0
    %v210 = vpop.f32.mrb[0].mxu0
    %211 = vdwg.mxu0
    %v212 = vadd.f32 %v99, %v207
    %v213 = vtanh.pop %v212
    %v214 = vpack.c.bf16 %v213, %v213
    %v215 = vld [vmem:[#allocation7] sm:$0xf]
    %v216 = vld [vmem:[#allocation7 + $0x4] sm:$0xf]
    %v217 = vld [vmem:[#allocation7 + $0x8] sm:$0xf]
    %v218 = vld [vmem:[#allocation7 + $0xc] sm:$0xf]
    %v219 = vld [vmem:[#allocation7 + $0x10] sm:$0xf]
    %v220 = vld [vmem:[#allocation7 + $0x14] sm:$0xf]
    %v221 = vld [vmem:[#allocation7 + $0x18] sm:$0xf]
    %v222 = vld [vmem:[#allocation7 + $0x1c] sm:$0xf]
    %v223 = vld [vmem:[#allocation7 + $0x20] sm:$0xf]
    %v224 = vld [vmem:[#allocation7 + $0x24] sm:$0xf]
    %v225 = vld [vmem:[#allocation7 + $0x28] sm:$0xf]
    %v226 = vld [vmem:[#allocation7 + $0x2c] sm:$0xf]
    %v227 = vld [vmem:[#allocation7 + $0x30] sm:$0xf]
    %v228 = vld [vmem:[#allocation7 + $0x34] sm:$0xf]
    %v229 = vld [vmem:[#allocation7 + $0x38] sm:$0xf]
    %v230 = vld [vmem:[#allocation7 + $0x3c] sm:$0xf]
    %v231 = vld [vmem:[%s4] sm:$0x1]
    %v233 = vlaneseq
    %v234 = vshrl.u32 %v233, 7
    %v235 = vsub.s32 0, %v234
    %v236 = vrot.slane %v231, %v235
    %v254 = vunpack.c.l.b16 %v215
    %v255 = vunpack.c.l.b16 %v216
    %v256 = vunpack.c.l.b16 %v217
    %v257 = vunpack.c.l.b16 %v218
    %v258 = vunpack.c.l.b16 %v219
    %v259 = vunpack.c.l.b16 %v220
    %v260 = vunpack.c.l.b16 %v221
    %v261 = vunpack.c.l.b16 %v222
    %v262 = vunpack.c.l.b16 %v223
    %v263 = vunpack.c.l.b16 %v224
    %v264 = vunpack.c.l.b16 %v225
    %v265 = vunpack.c.l.b16 %v226
    %v266 = vunpack.c.l.b16 %v227
    %v267 = vunpack.c.l.b16 %v228
    %v268 = vunpack.c.l.b16 %v229
    %v269 = vunpack.c.l.b16 %v230
    %v270 = vpack.c.b16 %v255, %v254
    %v271 = vpack.c.b16 %v257, %v256
    %v272 = vpack.c.b16 %v259, %v258
    %v273 = vpack.c.b16 %v261, %v260
    %v274 = vpack.c.b16 %v263, %v262
    %v275 = vpack.c.b16 %v265, %v264
    %v276 = vpack.c.b16 %v267, %v266
    %v277 = vpack.c.b16 %v269, %v268
    %286 = vmatprep.subr.bf16.mxu0 0
    %287 = vmatpush1.bf16.msra.mxu0 %v270
    %288 = vmatprep.subr.bf16.mxu0 0
    %289 = vmatpush1.bf16.msra.mxu0 %v271
    %290 = vmatprep.subr.bf16.mxu0 0
    %291 = vmatpush1.bf16.msra.mxu0 %v272
    %292 = vmatprep.subr.bf16.mxu0 0
    %293 = vmatpush1.bf16.msra.mxu0 %v273
    %294 = vmatprep.subr.bf16.mxu0 0
    %295 = vmatpush1.bf16.msra.mxu0 %v274
    %296 = vmatprep.subr.bf16.mxu0 0
    %297 = vmatpush1.bf16.msra.mxu0 %v275
    %298 = vmatprep.subr.bf16.mxu0 0
    %299 = vmatpush1.bf16.msra.mxu0 %v276
    %300 = vmatprep.subr.bf16.mxu0 0
    %301 = vmatpush1.bf16.msra.mxu0 %v277
    %302 = vmatprep.subr.bf16.mxu0 0
    %303 = vmatpush1.bf16.msra.mxu0 0
    %304 = vmatprep.subr.bf16.mxu0 0
    %305 = vmatpush1.bf16.msra.mxu0 0
    %306 = vmatprep.subr.bf16.mxu0 0
    %307 = vmatpush1.bf16.msra.mxu0 0
    %308 = vmatprep.subr.bf16.mxu0 0
    %309 = vmatpush1.bf16.msra.mxu0 0
    %310 = vmatprep.subr.bf16.mxu0 0
    %311 = vmatpush1.bf16.msra.mxu0 0
    %312 = vmatprep.subr.bf16.mxu0 0
    %313 = vmatpush1.bf16.msra.mxu0 0
    %314 = vmatprep.subr.bf16.mxu0 0
    %315 = vmatpush1.bf16.msra.mxu0 0
    %316 = vmatprep.subr.bf16.mxu0 0
    %317 = vmatpush1.bf16.msra.mxu0 0
    %318 = vmatprep.mubr.bf16.mxu0 0
    %319 = vmatmul.mubr.bf16.gmra.mrb[0].mxu0 %v214
    %v320 = vpop.f32.mrb[0].mxu0
    %v321 = vadd.f32 %v236, %v320
    %v322 = vpop.f32.mrb[0].mxu0
    %v323 = vpop.f32.mrb[0].mxu0
    %v324 = vpop.f32.mrb[0].mxu0
    %325 = vdwg.mxu0
    %v326 = vmul.f32 %v99, %v321
    %v327 = vadd.f32 %v98, %v326
    %v328 = vpack.c.bf16 %v327, %v327
    %v329 = vld [vmem:[#allocation10] sm:$0xf]
    %v330 = vld [vmem:[#allocation10 + $0x4] sm:$0xf]
    %v331 = vld [vmem:[#allocation10 + $0x8] sm:$0xf]
    %v332 = vld [vmem:[#allocation10 + $0xc] sm:$0xf]
    %v333 = vld [vmem:[#allocation10 + $0x10] sm:$0xf]
    %v334 = vld [vmem:[#allocation10 + $0x14] sm:$0xf]
    %v335 = vld [vmem:[#allocation10 + $0x18] sm:$0xf]
    %v336 = vld [vmem:[#allocation10 + $0x1c] sm:$0xf]
    %v337 = vld [vmem:[#allocation10 + $0x20] sm:$0xf]
    %v338 = vld [vmem:[#allocation10 + $0x24] sm:$0xf]
    %v339 = vld [vmem:[#allocation10 + $0x28] sm:$0xf]
    %v340 = vld [vmem:[#allocation10 + $0x2c] sm:$0xf]
    %v341 = vld [vmem:[#allocation10 + $0x30] sm:$0xf]
    %v342 = vld [vmem:[#allocation10 + $0x34] sm:$0xf]
    %v343 = vld [vmem:[#allocation10 + $0x38] sm:$0xf]
    %v344 = vld [vmem:[#allocation10 + $0x3c] sm:$0xf]
    %v345 = vld [vmem:[%s8] sm:$0x1]
    %v347 = vlaneseq
    %v348 = vshrl.u32 %v347, 7
    %v349 = vsub.s32 0, %v348
    %v350 = vrot.slane %v345, %v349
    %v368 = vunpack.c.l.b16 %v329
    %v369 = vunpack.c.l.b16 %v330
    %v370 = vunpack.c.l.b16 %v331
    %v371 = vunpack.c.l.b16 %v332
    %v372 = vunpack.c.l.b16 %v333
    %v373 = vunpack.c.l.b16 %v334
    %v374 = vunpack.c.l.b16 %v335
    %v375 = vunpack.c.l.b16 %v336
    %v376 = vunpack.c.l.b16 %v337
    %v377 = vunpack.c.l.b16 %v338
    %v378 = vunpack.c.l.b16 %v339
    %v379 = vunpack.c.l.b16 %v340
    %v380 = vunpack.c.l.b16 %v341
    %v381 = vunpack.c.l.b16 %v342
    %v382 = vunpack.c.l.b16 %v343
    %v383 = vunpack.c.l.b16 %v344
    %v384 = vpack.c.b16 %v369, %v368
    %v385 = vpack.c.b16 %v371, %v370
    %v386 = vpack.c.b16 %v373, %v372
    %v387 = vpack.c.b16 %v375, %v374
    %v388 = vpack.c.b16 %v377, %v376
    %v389 = vpack.c.b16 %v379, %v378
    %v390 = vpack.c.b16 %v381, %v380
    %v391 = vpack.c.b16 %v383, %v382
    %400 = vmatprep.subr.bf16.mxu0 0
    %401 = vmatpush1.bf16.msra.mxu0 %v384
    %402 = vmatprep.subr.bf16.mxu0 0
    %403 = vmatpush1.bf16.msra.mxu0 %v385
    %404 = vmatprep.subr.bf16.mxu0 0
    %405 = vmatpush1.bf16.msra.mxu0 %v386
    %406 = vmatprep.subr.bf16.mxu0 0
    %407 = vmatpush1.bf16.msra.mxu0 %v387
    %408 = vmatprep.subr.bf16.mxu0 0
    %409 = vmatpush1.bf16.msra.mxu0 %v388
    %410 = vmatprep.subr.bf16.mxu0 0
    %411 = vmatpush1.bf16.msra.mxu0 %v389
    %412 = vmatprep.subr.bf16.mxu0 0
    %413 = vmatpush1.bf16.msra.mxu0 %v390
    %414 = vmatprep.subr.bf16.mxu0 0
    %415 = vmatpush1.bf16.msra.mxu0 %v391
    %416 = vmatprep.subr.bf16.mxu0 0
    %417 = vmatpush1.bf16.msra.mxu0 0
    %418 = vmatprep.subr.bf16.mxu0 0
    %419 = vmatpush1.bf16.msra.mxu0 0
    %420 = vmatprep.subr.bf16.mxu0 0
    %421 = vmatpush1.bf16.msra.mxu0 0
    %422 = vmatprep.subr.bf16.mxu0 0
    %423 = vmatpush1.bf16.msra.mxu0 0
    %424 = vmatprep.subr.bf16.mxu0 0
    %425 = vmatpush1.bf16.msra.mxu0 0
    %426 = vmatprep.subr.bf16.mxu0 0
    %427 = vmatpush1.bf16.msra.mxu0 0
    %428 = vmatprep.subr.bf16.mxu0 0
    %429 = vmatpush1.bf16.msra.mxu0 0
    %430 = vmatprep.subr.bf16.mxu0 0
    %431 = vmatpush1.bf16.msra.mxu0 0
    %432 = vmatprep.mubr.bf16.mxu0 0
    %433 = vmatmul.mubr.bf16.gmra.mrb[0].mxu0 %v328
    %v434 = vpop.f32.mrb[0].mxu0
    %v435 = vadd.f32 %v350, %v434
    %v436 = vpop.f32.mrb[0].mxu0
    %v437 = vpop.f32.mrb[0].mxu0
    %v438 = vpop.f32.mrb[0].mxu0
    %439 = vdwg.mxu0
    %440 = vst [vmem:[#allocation11] sm:$0xff] %v435
    // Predicated region
    $region58: #{tpu_custom_call.1} parent=1 // pred_check
      _
    $region59: #{tpu_custom_call.1} parent=1 // pred_check_branch
      %442 = sbr.rel (0) target = $region61
    $region60: #{tpu_custom_call.1} parent=1 // pred_region
      %s444 = ssub.s32 128, 128
      %445 = vsyncadd [#allocation4], %s444
      %s447 = sshll.u32 [#allocation11], 4
      %s448 = int_to_ptr.vmem [resolvable:$true] %s447
      %450 = dma.vmem_to_hbm [thread:$0]  %s448, 128, %s9, [#allocation4]
    $region61: #{tpu_custom_call.1} parent=1 // pred_fallthru
      _
    // Predicated region
    $region62: #{tpu_custom_call.1} parent=1 // pred_check
      _
    $region63: #{tpu_custom_call.1} parent=1 // pred_check_branch
      %452 = sbr.rel (0) target = $region65
    $region64: #{tpu_custom_call.1} parent=1 // pred_region
      %453 = dma.done [#allocation4], 128
    $region65: #{tpu_custom_call.1} parent=1 // pred_fallthru
      _
    %454 = vsyncpa [#allocation3], 1
    %455 = vsyncpa [#allocation6], 1
    %456 = vsyncpa [#allocation9], 1
    %457 = vsyncpa [#allocation4], 1

// kernel: tpu_custom_call.1
$region0: #{tpu_custom_call.1}
  #allocation0 [shape = 'u32[]', space=smem, size = 0x4, offset = 0x4, fixed_abs, tag = 'smem constant byte address 0x4 - core index']
  #allocation1 [shape = 'u32[144,128]{1,0:T(1,128)}', space=vmem, size = 0x12000, scoped, tag = 'internal scratch']
  %s0 = inlined_call_operand.hbm [shape: f32[8,128], index: 0, kind: input, shape index: {}]
  %s1 = inlined_call_operand.hbm [shape: f32[8,128], index: 1, kind: input, shape index: {}]
  %s2 = inlined_call_operand.vmem [shape: bf16[8,128], index: 2, kind: input, shape index: {}]
  %s3 = inlined_call_operand.hbm [shape: bf16[128,128], index: 3, kind: input, shape index: {}]
  %s4 = inlined_call_operand.vmem [shape: f32[1,128], index: 4, kind: input, shape index: {}]
  %s5 = inlined_call_operand.hbm [shape: bf16[128,128], index: 5, kind: input, shape index: {}]
  %s6 = inlined_call_operand.vmem [shape: f32[1,128], index: 6, kind: input, shape index: {}]
  %s7 = inlined_call_operand.hbm [shape: bf16[128,128], index: 7, kind: input, shape index: {}]
  %s8 = inlined_call_operand.vmem [shape: f32[1,128], index: 8, kind: input, shape index: {}]
  %s9 = inlined_call_operand.hbm [shape: f32[8,128], index: 9, kind: output, shape index: {}]
  %s10 = sld [smem:[#allocation0]]
  $region66: #{tpu_custom_call.1} parent=0
    _
  %s12 = ssub.s32 1, %s10
  %s13 = scalar_select 0, %s12, %s10
  $region1: #{tpu_custom_call.1} parent=0
    #allocation2 [shape = 'u8[4096]{0}', space=vmem, size = 0x1000, scoped, tag = 'input window, operand 0, single buffered']
    #allocation3 [shape = 's32[1]{0}', space=sflag, size = 0x4, scoped, tag = 'scoped memory for tpu_custom_call.1']
    #allocation4 [shape = 's32[1]{0}', space=sflag, size = 0x4, scoped, tag = 'scoped memory for tpu_custom_call.1']
    #allocation5 [shape = 'u8[4096]{0}', space=vmem, size = 0x1000, scoped, tag = 'input window, operand 1, single buffered']
    #allocation6 [shape = 's32[1]{0}', space=sflag, size = 0x4, scoped, tag = 'scoped memory for tpu_custom_call.1']
    #allocation7 [shape = 'u8[32768]{0}', space=vmem, size = 0x8000, scoped, tag = 'input window, operand 3, single buffered']
    #allocation8 [shape = 'u8[32768]{0}', space=vmem, size = 0x8000, scoped, tag = 'input window, operand 5, single buffered']
    #allocation9 [shape = 's32[1]{0}', space=sflag, size = 0x4, scoped, tag = 'scoped memory for tpu_custom_call.1']
    #allocation10 [shape = 'u8[32768]{0}', space=vmem, size = 0x8000, scoped, tag = 'input window, operand 7, single buffered']
    #allocation11 [shape = 'u8[4096]{0}', space=vmem, size = 0x1000, scoped, tag = 'output window, operand 0, single buffered']
    %14 = vsyncpa [#allocation3], 0
    %15 = vsyncpa [#allocation6], 0
    %16 = vsyncpa [#allocation9], 0
    %17 = vsyncpa [#allocation4], 0
    // Predicated region
    $region2: #{tpu_custom_call.1} parent=1 // pred_check
      _
    $region3: #{tpu_custom_call.1} parent=1 // pred_check_branch
      %19 = sbr.rel (0) target = $region5
    $region4: #{tpu_custom_call.1} parent=1 // pred_region
      %s21 = ssub.s32 128, 128
      %22 = vsyncadd [#allocation3], %s21
      %s24 = sshll.u32 [#allocation2], 4
      %s25 = int_to_ptr.vmem [resolvable:$true] %s24
      %27 = dma.hbm_to_vmem [thread:$0]  %s0, 128, %s25, [#allocation3]
    $region5: #{tpu_custom_call.1} parent=1 // pred_fallthru
      _
    // Predicated region
    $region6: #{tpu_custom_call.1} parent=1 // pred_check
      _
    $region7: #{tpu_custom_call.1} parent=1 // pred_check_branch
      %29 = sbr.rel (0) target = $region9
    $region8: #{tpu_custom_call.1} parent=1 // pred_region
      %s31 = ssub.s32 128, 128
      %32 = vsyncadd [#allocation6], %s31
      %s34 = sshll.u32 [#allocation5], 4
      %s35 = int_to_ptr.vmem [resolvable:$true] %s34
      %37 = dma.hbm_to_vmem [thread:$0]  %s1, 128, %s35, [#allocation6]
    $region9: #{tpu_custom_call.1} parent=1 // pred_fallthru
      _
    // Predicated region
    $region10: #{tpu_custom_call.1} parent=1 // pred_check
      _
    $region11: #{tpu_custom_call.1} parent=1 // pred_check_branch
      %39 = sbr.rel (0) target = $region13
    $region12: #{tpu_custom_call.1} parent=1 // pred_region
      _
    $region13: #{tpu_custom_call.1} parent=1 // pred_fallthru
      _
    // Predicated region
    $region14: #{tpu_custom_call.1} parent=1 // pred_check
      _
    $region15: #{tpu_custom_call.1} parent=1 // pred_check_branch
      %41 = sbr.rel (0) target = $region17
    $region16: #{tpu_custom_call.1} parent=1 // pred_region
      %s43 = ssub.s32 1024, 1024
      %44 = vsyncadd [#allocation6], %s43
      %s45 = sshll.u32 [#allocation7], 4
      %s46 = int_to_ptr.vmem [resolvable:$true] %s45
      %51 = dma.hbm_to_vmem [thread:$0]  %s3, 1024, %s46, [#allocation6], 64, 64, 4
    $region17: #{tpu_custom_call.1} parent=1 // pred_fallthru
      _
    // Predicated region
    $region18: #{tpu_custom_call.1} parent=1 // pred_check
      _
    $region19: #{tpu_custom_call.1} parent=1 // pred_check_branch
      %53 = sbr.rel (0) target = $region21
    $region20: #{tpu_custom_call.1} parent=1 // pred_region
      _
    $region21: #{tpu_custom_call.1} parent=1 // pred_fallthru
      _
    // Predicated region
    $region22: #{tpu_custom_call.1} parent=1 // pred_check
      _
    $region23: #{tpu_custom_call.1} parent=1 // pred_check_branch
      %55 = sbr.rel (0) target = $region25
    $region24: #{tpu_custom_call.1} parent=1 // pred_region
      %s57 = ssub.s32 1024, 1024
      %58 = vsyncadd [#allocation9], %s57
      %s59 = sshll.u32 [#allocation8], 4
      %s60 = int_to_ptr.vmem [resolvable:$true] %s59
      %65 = dma.hbm_to_vmem [thread:$0]  %s5, 1024, %s60, [#allocation9], 64, 64, 4
    $region25: #{tpu_custom_call.1} parent=1 // pred_fallthru
      _
    // Predicated region
    $region26: #{tpu_custom_call.1} parent=1 // pred_check
      _
    $region27: #{tpu_custom_call.1} parent=1 // pred_check_branch
      %67 = sbr.rel (0) target = $region29
    $region28: #{tpu_custom_call.1} parent=1 // pred_region
      _
    $region29: #{tpu_custom_call.1} parent=1 // pred_fallthru
      _
    // Predicated region
    $region30: #{tpu_custom_call.1} parent=1 // pred_check
      _
    $region31: #{tpu_custom_call.1} parent=1 // pred_check_branch
      %69 = sbr.rel (0) target = $region33
    $region32: #{tpu_custom_call.1} parent=1 // pred_region
      %s71 = ssub.s32 1024, 1024
      %72 = vsyncadd [#allocation9], %s71
      %s73 = sshll.u32 [#allocation10], 4
      %s74 = int_to_ptr.vmem [resolvable:$true] %s73
      %79 = dma.hbm_to_vmem [thread:$0]  %s7, 1024, %s74, [#allocation9], 64, 64, 4
    $region33: #{tpu_custom_call.1} parent=1 // pred_fallthru
      _
    // Predicated region
    $region34: #{tpu_custom_call.1} parent=1 // pred_check
      _
    $region35: #{tpu_custom_call.1} parent=1 // pred_check_branch
      %81 = sbr.rel (0) target = $region37
    $region36: #{tpu_custom_call.1} parent=1 // pred_region
      _
    $region37: #{tpu_custom_call.1} parent=1 // pred_fallthru
      _
    // Predicated region
    $region38: #{tpu_custom_call.1} parent=1 // pred_check
      _
    $region39: #{tpu_custom_call.1} parent=1 // pred_check_branch
      %83 = sbr.rel (0) target = $region41
    $region40: #{tpu_custom_call.1} parent=1 // pred_region
      %84 = dma.done [#allocation3], 128
    $region41: #{tpu_custom_call.1} parent=1 // pred_fallthru
      _
    // Predicated region
    $region42: #{tpu_custom_call.1} parent=1 // pred_check
      _
    $region43: #{tpu_custom_call.1} parent=1 // pred_check_branch
      %86 = sbr.rel (0) target = $region45
    $region44: #{tpu_custom_call.1} parent=1 // pred_region
      %87 = dma.done [#allocation6], 128
    $region45: #{tpu_custom_call.1} parent=1 // pred_fallthru
      _
    // Predicated region
    $region46: #{tpu_custom_call.1} parent=1 // pred_check
      _
    $region47: #{tpu_custom_call.1} parent=1 // pred_check_branch
      %89 = sbr.rel (0) target = $region49
    $region48: #{tpu_custom_call.1} parent=1 // pred_region
      %90 = dma.done [#allocation6], 1024
    $region49: #{tpu_custom_call.1} parent=1 // pred_fallthru
      _
    // Predicated region
    $region50: #{tpu_custom_call.1} parent=1 // pred_check
      _
    $region51: #{tpu_custom_call.1} parent=1 // pred_check_branch
      %92 = sbr.rel (0) target = $region53
    $region52: #{tpu_custom_call.1} parent=1 // pred_region
      %93 = dma.done [#allocation9], 1024
    $region53: #{tpu_custom_call.1} parent=1 // pred_fallthru
      _
    // Predicated region
    $region54: #{tpu_custom_call.1} parent=1 // pred_check
      _
    $region55: #{tpu_custom_call.1} parent=1 // pred_check_branch
      %95 = sbr.rel (0) target = $region57
    $region56: #{tpu_custom_call.1} parent=1 // pred_region
      %96 = dma.done [#allocation9], 1024
    $region57: #{tpu_custom_call.1} parent=1 // pred_fallthru
      _
    %v98 = vld [vmem:[#allocation2] sm:$0xff]
    %v99 = vld [vmem:[#allocation5] sm:$0xff]
    %v100 = vld [vmem:[%s2] sm:$0xf]
    %v101 = vld [vmem:[#allocation8] sm:$0xf]
    %v102 = vld [vmem:[#allocation8 + $0x4] sm:$0xf]
    %v103 = vld [vmem:[#allocation8 + $0x8] sm:$0xf]
    %v104 = vld [vmem:[#allocation8 + $0xc] sm:$0xf]
    %v105 = vld [vmem:[#allocation8 + $0x10] sm:$0xf]
    %v106 = vld [vmem:[#allocation8 + $0x14] sm:$0xf]
    %v107 = vld [vmem:[#allocation8 + $0x18] sm:$0xf]
    %v108 = vld [vmem:[#allocation8 + $0x1c] sm:$0xf]
    %v109 = vld [vmem:[#allocation8 + $0x20] sm:$0xf]
    %v110 = vld [vmem:[#allocation8 + $0x24] sm:$0xf]
    %v111 = vld [vmem:[#allocation8 + $0x28] sm:$0xf]
    %v112 = vld [vmem:[#allocation8 + $0x2c] sm:$0xf]
    %v113 = vld [vmem:[#allocation8 + $0x30] sm:$0xf]
    %v114 = vld [vmem:[#allocation8 + $0x34] sm:$0xf]
    %v115 = vld [vmem:[#allocation8 + $0x38] sm:$0xf]
    %v116 = vld [vmem:[#allocation8 + $0x3c] sm:$0xf]
    %v117 = vld [vmem:[%s6] sm:$0x1]
    %v119 = vlaneseq
    %v120 = vshrl.u32 %v119, 7
    %v121 = vsub.s32 0, %v120
    %v122 = vrot.slane %v117, %v121
    %v140 = vunpack.c.l.b16 %v101
    %v141 = vunpack.c.l.b16 %v102
    %v142 = vunpack.c.l.b16 %v103
    %v143 = vunpack.c.l.b16 %v104
    %v144 = vunpack.c.l.b16 %v105
    %v145 = vunpack.c.l.b16 %v106
    %v146 = vunpack.c.l.b16 %v107
    %v147 = vunpack.c.l.b16 %v108
    %v148 = vunpack.c.l.b16 %v109
    %v149 = vunpack.c.l.b16 %v110
    %v150 = vunpack.c.l.b16 %v111
    %v151 = vunpack.c.l.b16 %v112
    %v152 = vunpack.c.l.b16 %v113
    %v153 = vunpack.c.l.b16 %v114
    %v154 = vunpack.c.l.b16 %v115
    %v155 = vunpack.c.l.b16 %v116
    %v156 = vpack.c.b16 %v141, %v140
    %v157 = vpack.c.b16 %v143, %v142
    %v158 = vpack.c.b16 %v145, %v144
    %v159 = vpack.c.b16 %v147, %v146
    %v160 = vpack.c.b16 %v149, %v148
    %v161 = vpack.c.b16 %v151, %v150
    %v162 = vpack.c.b16 %v153, %v152
    %v163 = vpack.c.b16 %v155, %v154
    %172 = vmatprep.subr.bf16.mxu0 0
    %173 = vmatpush1.bf16.msra.mxu0 %v156
    %174 = vmatprep.subr.bf16.mxu0 0
    %175 = vmatpush1.bf16.msra.mxu0 %v157
    %176 = vmatprep.subr.bf16.mxu0 0
    %177 = vmatpush1.bf16.msra.mxu0 %v158
    %178 = vmatprep.subr.bf16.mxu0 0
    %179 = vmatpush1.bf16.msra.mxu0 %v159
    %180 = vmatprep.subr.bf16.mxu0 0
    %181 = vmatpush1.bf16.msra.mxu0 %v160
    %182 = vmatprep.subr.bf16.mxu0 0
    %183 = vmatpush1.bf16.msra.mxu0 %v161
    %184 = vmatprep.subr.bf16.mxu0 0
    %185 = vmatpush1.bf16.msra.mxu0 %v162
    %186 = vmatprep.subr.bf16.mxu0 0
    %187 = vmatpush1.bf16.msra.mxu0 %v163
    %188 = vmatprep.subr.bf16.mxu0 0
    %189 = vmatpush1.bf16.msra.mxu0 0
    %190 = vmatprep.subr.bf16.mxu0 0
    %191 = vmatpush1.bf16.msra.mxu0 0
    %192 = vmatprep.subr.bf16.mxu0 0
    %193 = vmatpush1.bf16.msra.mxu0 0
    %194 = vmatprep.subr.bf16.mxu0 0
    %195 = vmatpush1.bf16.msra.mxu0 0
    %196 = vmatprep.subr.bf16.mxu0 0
    %197 = vmatpush1.bf16.msra.mxu0 0
    %198 = vmatprep.subr.bf16.mxu0 0
    %199 = vmatpush1.bf16.msra.mxu0 0
    %200 = vmatprep.subr.bf16.mxu0 0
    %201 = vmatpush1.bf16.msra.mxu0 0
    %202 = vmatprep.subr.bf16.mxu0 0
    %203 = vmatpush1.bf16.msra.mxu0 0
    %204 = vmatprep.mubr.bf16.mxu0 0
    %205 = vmatmul.mubr.bf16.gmra.mrb[0].mxu0 %v100
    %v206 = vpop.f32.mrb[0].mxu0
    %v207 = vadd.f32 %v122, %v206
    %v208 = vpop.f32.mrb[0].mxu0
    %v209 = vpop.f32.mrb[0].mxu0
    %v210 = vpop.f32.mrb[0].mxu0
    %211 = vdwg.mxu0
    %v212 = vadd.f32 %v99, %v207
    %v213 = vtanh.pop %v212
    %v214 = vpack.c.bf16 %v213, %v213
    %v215 = vld [vmem:[#allocation7] sm:$0xf]
    %v216 = vld [vmem:[#allocation7 + $0x4] sm:$0xf]
    %v217 = vld [vmem:[#allocation7 + $0x8] sm:$0xf]
    %v218 = vld [vmem:[#allocation7 + $0xc] sm:$0xf]
    %v219 = vld [vmem:[#allocation7 + $0x10] sm:$0xf]
    %v220 = vld [vmem:[#allocation7 + $0x14] sm:$0xf]
    %v221 = vld [vmem:[#allocation7 + $0x18] sm:$0xf]
    %v222 = vld [vmem:[#allocation7 + $0x1c] sm:$0xf]
    %v223 = vld [vmem:[#allocation7 + $0x20] sm:$0xf]
    %v224 = vld [vmem:[#allocation7 + $0x24] sm:$0xf]
    %v225 = vld [vmem:[#allocation7 + $0x28] sm:$0xf]
    %v226 = vld [vmem:[#allocation7 + $0x2c] sm:$0xf]
    %v227 = vld [vmem:[#allocation7 + $0x30] sm:$0xf]
    %v228 = vld [vmem:[#allocation7 + $0x34] sm:$0xf]
    %v229 = vld [vmem:[#allocation7 + $0x38] sm:$0xf]
    %v230 = vld [vmem:[#allocation7 + $0x3c] sm:$0xf]
    %v231 = vld [vmem:[%s4] sm:$0x1]
    %v233 = vlaneseq
    %v234 = vshrl.u32 %v233, 7
    %v235 = vsub.s32 0, %v234
    %v236 = vrot.slane %v231, %v235
    %v254 = vunpack.c.l.b16 %v215
    %v255 = vunpack.c.l.b16 %v216
    %v256 = vunpack.c.l.b16 %v217
    %v257 = vunpack.c.l.b16 %v218
    %v258 = vunpack.c.l.b16 %v219
    %v259 = vunpack.c.l.b16 %v220
    %v260 = vunpack.c.l.b16 %v221
    %v261 = vunpack.c.l.b16 %v222
    %v262 = vunpack.c.l.b16 %v223
    %v263 = vunpack.c.l.b16 %v224
    %v264 = vunpack.c.l.b16 %v225
    %v265 = vunpack.c.l.b16 %v226
    %v266 = vunpack.c.l.b16 %v227
    %v267 = vunpack.c.l.b16 %v228
    %v268 = vunpack.c.l.b16 %v229
    %v269 = vunpack.c.l.b16 %v230
    %v270 = vpack.c.b16 %v255, %v254
    %v271 = vpack.c.b16 %v257, %v256
    %v272 = vpack.c.b16 %v259, %v258
    %v273 = vpack.c.b16 %v261, %v260
    %v274 = vpack.c.b16 %v263, %v262
    %v275 = vpack.c.b16 %v265, %v264
    %v276 = vpack.c.b16 %v267, %v266
    %v277 = vpack.c.b16 %v269, %v268
    %286 = vmatprep.subr.bf16.mxu0 0
    %287 = vmatpush1.bf16.msra.mxu0 %v270
    %288 = vmatprep.subr.bf16.mxu0 0
    %289 = vmatpush1.bf16.msra.mxu0 %v271
    %290 = vmatprep.subr.bf16.mxu0 0
    %291 = vmatpush1.bf16.msra.mxu0 %v272
    %292 = vmatprep.subr.bf16.mxu0 0
    %293 = vmatpush1.bf16.msra.mxu0 %v273
    %294 = vmatprep.subr.bf16.mxu0 0
    %295 = vmatpush1.bf16.msra.mxu0 %v274
    %296 = vmatprep.subr.bf16.mxu0 0
    %297 = vmatpush1.bf16.msra.mxu0 %v275
    %298 = vmatprep.subr.bf16.mxu0 0
    %299 = vmatpush1.bf16.msra.mxu0 %v276
    %300 = vmatprep.subr.bf16.mxu0 0
    %301 = vmatpush1.bf16.msra.mxu0 %v277
    %302 = vmatprep.subr.bf16.mxu0 0
    %303 = vmatpush1.bf16.msra.mxu0 0
    %304 = vmatprep.subr.bf16.mxu0 0
    %305 = vmatpush1.bf16.msra.mxu0 0
    %306 = vmatprep.subr.bf16.mxu0 0
    %307 = vmatpush1.bf16.msra.mxu0 0
    %308 = vmatprep.subr.bf16.mxu0 0
    %309 = vmatpush1.bf16.msra.mxu0 0
    %310 = vmatprep.subr.bf16.mxu0 0
    %311 = vmatpush1.bf16.msra.mxu0 0
    %312 = vmatprep.subr.bf16.mxu0 0
    %313 = vmatpush1.bf16.msra.mxu0 0
    %314 = vmatprep.subr.bf16.mxu0 0
    %315 = vmatpush1.bf16.msra.mxu0 0
    %316 = vmatprep.subr.bf16.mxu0 0
    %317 = vmatpush1.bf16.msra.mxu0 0
    %318 = vmatprep.mubr.bf16.mxu0 0
    %319 = vmatmul.mubr.bf16.gmra.mrb[0].mxu0 %v214
    %v320 = vpop.f32.mrb[0].mxu0
    %v321 = vadd.f32 %v236, %v320
    %v322 = vpop.f32.mrb[0].mxu0
    %v323 = vpop.f32.mrb[0].mxu0
    %v324 = vpop.f32.mrb[0].mxu0
    %325 = vdwg.mxu0
    %v326 = vmul.f32 %v99, %v321
    %v327 = vadd.f32 %v98, %v326
    %v328 = vpack.c.bf16 %v327, %v327
    %v329 = vld [vmem:[#allocation10] sm:$0xf]
    %v330 = vld [vmem:[#allocation10 + $0x4] sm:$0xf]
    %v331 = vld [vmem:[#allocation10 + $0x8] sm:$0xf]
    %v332 = vld [vmem:[#allocation10 + $0xc] sm:$0xf]
    %v333 = vld [vmem:[#allocation10 + $0x10] sm:$0xf]
    %v334 = vld [vmem:[#allocation10 + $0x14] sm:$0xf]
    %v335 = vld [vmem:[#allocation10 + $0x18] sm:$0xf]
    %v336 = vld [vmem:[#allocation10 + $0x1c] sm:$0xf]
    %v337 = vld [vmem:[#allocation10 + $0x20] sm:$0xf]
    %v338 = vld [vmem:[#allocation10 + $0x24] sm:$0xf]
    %v339 = vld [vmem:[#allocation10 + $0x28] sm:$0xf]
    %v340 = vld [vmem:[#allocation10 + $0x2c] sm:$0xf]
    %v341 = vld [vmem:[#allocation10 + $0x30] sm:$0xf]
    %v342 = vld [vmem:[#allocation10 + $0x34] sm:$0xf]
    %v343 = vld [vmem:[#allocation10 + $0x38] sm:$0xf]
    %v344 = vld [vmem:[#allocation10 + $0x3c] sm:$0xf]
    %v345 = vld [vmem:[%s8] sm:$0x1]
    %v347 = vlaneseq
    %v348 = vshrl.u32 %v347, 7
    %v349 = vsub.s32 0, %v348
    %v350 = vrot.slane %v345, %v349
    %v368 = vunpack.c.l.b16 %v329
    %v369 = vunpack.c.l.b16 %v330
    %v370 = vunpack.c.l.b16 %v331
    %v371 = vunpack.c.l.b16 %v332
    %v372 = vunpack.c.l.b16 %v333
    %v373 = vunpack.c.l.b16 %v334
    %v374 = vunpack.c.l.b16 %v335
    %v375 = vunpack.c.l.b16 %v336
    %v376 = vunpack.c.l.b16 %v337
    %v377 = vunpack.c.l.b16 %v338
    %v378 = vunpack.c.l.b16 %v339
    %v379 = vunpack.c.l.b16 %v340
    %v380 = vunpack.c.l.b16 %v341
    %v381 = vunpack.c.l.b16 %v342
    %v382 = vunpack.c.l.b16 %v343
    %v383 = vunpack.c.l.b16 %v344
    %v384 = vpack.c.b16 %v369, %v368
    %v385 = vpack.c.b16 %v371, %v370
    %v386 = vpack.c.b16 %v373, %v372
    %v387 = vpack.c.b16 %v375, %v374
    %v388 = vpack.c.b16 %v377, %v376
    %v389 = vpack.c.b16 %v379, %v378
    %v390 = vpack.c.b16 %v381, %v380
    %v391 = vpack.c.b16 %v383, %v382
    %400 = vmatprep.subr.bf16.mxu0 0
    %401 = vmatpush1.bf16.msra.mxu0 %v384
    %402 = vmatprep.subr.bf16.mxu0 0
    %403 = vmatpush1.bf16.msra.mxu0 %v385
    %404 = vmatprep.subr.bf16.mxu0 0
    %405 = vmatpush1.bf16.msra.mxu0 %v386
    %406 = vmatprep.subr.bf16.mxu0 0
    %407 = vmatpush1.bf16.msra.mxu0 %v387
    %408 = vmatprep.subr.bf16.mxu0 0
    %409 = vmatpush1.bf16.msra.mxu0 %v388
    %410 = vmatprep.subr.bf16.mxu0 0
    %411 = vmatpush1.bf16.msra.mxu0 %v389
    %412 = vmatprep.subr.bf16.mxu0 0
    %413 = vmatpush1.bf16.msra.mxu0 %v390
    %414 = vmatprep.subr.bf16.mxu0 0
    %415 = vmatpush1.bf16.msra.mxu0 %v391
    %416 = vmatprep.subr.bf16.mxu0 0
    %417 = vmatpush1.bf16.msra.mxu0 0
    %418 = vmatprep.subr.bf16.mxu0 0
    %419 = vmatpush1.bf16.msra.mxu0 0
    %420 = vmatprep.subr.bf16.mxu0 0
    %421 = vmatpush1.bf16.msra.mxu0 0
    %422 = vmatprep.subr.bf16.mxu0 0
    %423 = vmatpush1.bf16.msra.mxu0 0
    %424 = vmatprep.subr.bf16.mxu0 0
    %425 = vmatpush1.bf16.msra.mxu0 0
    %426 = vmatprep.subr.bf16.mxu0 0
    %427 = vmatpush1.bf16.msra.mxu0 0
    %428 = vmatprep.subr.bf16.mxu0 0
    %429 = vmatpush1.bf16.msra.mxu0 0
    %430 = vmatprep.subr.bf16.mxu0 0
    %431 = vmatpush1.bf16.msra.mxu0 0
    %432 = vmatprep.mubr.bf16.mxu0 0
    %433 = vmatmul.mubr.bf16.gmra.mrb[0].mxu0 %v328
    %v434 = vpop.f32.mrb[0].mxu0
    %v435 = vadd.f32 %v350, %v434
    %v436 = vpop.f32.mrb[0].mxu0
    %v437 = vpop.f32.mrb[0].mxu0
    %v438 = vpop.f32.mrb[0].mxu0
    %439 = vdwg.mxu0
    %440 = vst [vmem:[#allocation11] sm:$0xff] %v435
    // Predicated region
    $region58: #{tpu_custom_call.1} parent=1 // pred_check
      _
    $region59: #{tpu_custom_call.1} parent=1 // pred_check_branch
      %442 = sbr.rel (0) target = $region61
    $region60: #{tpu_custom_call.1} parent=1 // pred_region
      %s444 = ssub.s32 128, 128
      %445 = vsyncadd [#allocation4], %s444
      %s447 = sshll.u32 [#allocation11], 4
      %s448 = int_to_ptr.vmem [resolvable:$true] %s447
      %450 = dma.vmem_to_hbm [thread:$0]  %s448, 128, %s9, [#allocation4]
    $region61: #{tpu_custom_call.1} parent=1 // pred_fallthru
      _
    // Predicated region
    $region62: #{tpu_custom_call.1} parent=1 // pred_check
      _
    $region63: #{tpu_custom_call.1} parent=1 // pred_check_branch
      %452 = sbr.rel (0) target = $region65
    $region64: #{tpu_custom_call.1} parent=1 // pred_region
      %453 = dma.done [#allocation4], 128
    $region65: #{tpu_custom_call.1} parent=1 // pred_fallthru
      _
    %454 = vsyncpa [#allocation3], 1
    %455 = vsyncpa [#allocation6], 1
    %456 = vsyncpa [#allocation9], 1
    %457 = vsyncpa [#allocation4], 1

</llo_original>
